<compile_context>
chip_gen: v5e
topology: v5e:2x2
jax: 0.10.0
libtpu: 0.0.40
codegen_flags: <defaults>
</compile_context>

<pallas_src>
import functools

import jax
import jax.numpy as jnp
from jax.experimental import pallas as pl
from jax.experimental.pallas import tpu as pltpu


LANE = 128        # pad the output feature dim to a multiple of the lane width
MAX_TILE_B = 512  # batch tile for large batches (one step for B <= this)


def _round_up(x, m):
    return (x + m - 1) // m * m


def _policy_mlp_kernel(x_ref, w1_ref, b1_ref, w2_ref, b2_ref, w3_ref, b3_ref,
                       out_ref):
    """Fused 3-layer MLP forward on one (tile_b, ...) batch tile.

    Matmuls run in bf16 with f32 accumulation on the MXU; bias add and ReLU
    stay in f32 on the VPU (v5e has no bf16 VPU). Output stored as bf16.
    """
    x = x_ref[...]  # bf16 (tile_b, state_dim)

    # Layer 1: Linear(state_dim -> h1) + ReLU
    h1 = jnp.dot(x, w1_ref[...], preferred_element_type=jnp.float32)
    h1 = jnp.maximum(h1 + b1_ref[...], 0.0)

    # Layer 2: Linear(h1 -> h2) + ReLU
    h2 = jnp.dot(h1.astype(jnp.bfloat16), w2_ref[...],
                 preferred_element_type=jnp.float32)
    h2 = jnp.maximum(h2 + b2_ref[...], 0.0)

    # Layer 3: Linear(h2 -> padded action_dim), logits (no activation)
    logits = jnp.dot(h2.astype(jnp.bfloat16), w3_ref[...],
                     preferred_element_type=jnp.float32) + b3_ref[...]

    out_ref[...] = logits.astype(out_ref.dtype)


def prepare_policy_params(params):
    """One-time parameter prep (run once, outside the forward hot path).

    Casts matmul weights to bf16, biases to f32 row vectors, and pads the last
    layer (w3/b3) out to a lane-dense multiple of 128 columns.

    Returns (prepped_params_dict, action_dim).
    """
    h1 = params["w1"].shape[1]
    h2, action_dim = params["w3"].shape
    act_pad = _round_up(action_dim, LANE)

    w3 = jnp.zeros((h2, act_pad), jnp.bfloat16).at[:, :action_dim].set(
        params["w3"].astype(jnp.bfloat16))
    b3 = jnp.zeros((1, act_pad), jnp.float32).at[:, :action_dim].set(
        params["b3"].reshape(1, action_dim).astype(jnp.float32))

    prepped = {
        "w1": params["w1"].astype(jnp.bfloat16),
        "b1": params["b1"].reshape(1, h1).astype(jnp.float32),
        "w2": params["w2"].astype(jnp.bfloat16),
        "b2": params["b2"].reshape(1, params["w2"].shape[1]).astype(jnp.float32),
        "w3": w3,
        "b3": b3,
    }
    return prepped, action_dim


@functools.partial(jax.jit, static_argnames=("action_dim",))
def policy_network_forward(state, prepped, *, action_dim):
    """Run the fused policy MLP Pallas kernel.

    Args:
      state: (B, state_dim) float32 array.
      prepped: output dict of prepare_policy_params (bf16 weights, f32 biases,
               lane-dense padded last layer).
      action_dim: static int, true number of actions (pre-padding).
    Returns:
      (B, action_dim) float32 logits.
    """
    B, state_dim = state.shape
    w1, b1 = prepped["w1"], prepped["b1"]
    w2, b2 = prepped["w2"], prepped["b2"]
    w3, b3 = prepped["w3"], prepped["b3"]
    h1 = w1.shape[1]
    h2 = w2.shape[1]
    act_pad = w3.shape[1]

    # Batch tiling: single grid step for small batches (block == full array is
    # always legal); 512-row tiles for large batches with the ragged final
    # block handled by Pallas output masking -- no batch pad-copy in HBM.
    tile_b = B if B <= MAX_TILE_B else MAX_TILE_B
    grid = (pl.cdiv(B, tile_b),)

    x = state.astype(jnp.bfloat16)

    # Weights/biases: constant index_map -> single DMA, resident across steps.
    const = lambda a: pl.BlockSpec(a.shape, lambda i: (0, 0))

    flops = 2 * B * (state_dim * h1 + h1 * h2 + h2 * act_pad)
    bytes_accessed = (x.size * 2
                      + (w1.size + w2.size + w3.size) * 2
                      + (b1.size + b2.size + b3.size) * 4
                      + B * act_pad * 2)

    out = pl.pallas_call(
        _policy_mlp_kernel,
        out_shape=jax.ShapeDtypeStruct((B, act_pad), jnp.bfloat16),
        grid=grid,
        in_specs=[
            pl.BlockSpec((tile_b, state_dim), lambda i: (i, 0)),  # streamed
            const(w1), const(b1),
            const(w2), const(b2),
            const(w3), const(b3),
        ],
        out_specs=pl.BlockSpec((tile_b, act_pad), lambda i: (i, 0)),
        compiler_params=pltpu.CompilerParams(
            dimension_semantics=("parallel",)),  # megacore shard when grid > 1
        cost_estimate=pl.CostEstimate(
            flops=flops, transcendentals=0, bytes_accessed=bytes_accessed),
    )(x, w1, b1, w2, b2, w3, b3)

    return out[:, :action_dim].astype(jnp.float32)


def init_policy_params(key, state_dim, action_dim, hidden_layers=(128, 128)):
    """Deterministic init matching PyTorch nn.Linear default (uniform +-1/sqrt(fan_in))."""
    dims = [state_dim, *hidden_layers, action_dim]
    params = {}
    for i, (d_in, d_out) in enumerate(zip(dims[:-1], dims[1:]), start=1):
        key, kw, kb = jax.random.split(key, 3)
        bound = 1.0 / jnp.sqrt(d_in)
        params[f"w{i}"] = jax.random.uniform(
            kw, (d_in, d_out), jnp.float32, minval=-bound, maxval=bound)
        params[f"b{i}"] = jax.random.uniform(
            kb, (1, d_out), jnp.float32, minval=-bound, maxval=bound)
    return params


def policy_network_ref(state, params):
    """Pure-JAX f32 reference for correctness check."""
    h = jnp.maximum(state @ params["w1"] + params["b1"], 0.0)
    h = jnp.maximum(h @ params["w2"] + params["b2"], 0.0)
    return h @ params["w3"] + params["b3"]


if __name__ == "__main__":
    key = jax.random.PRNGKey(0)
    k_state, k_params = jax.random.split(key)

    # Small module dims matching the PyTorch defaults (hidden_layers=[128,128]).
    batch, state_dim, action_dim = 256, 16, 8
    hidden_layers = (128, 128)

    state = jax.random.normal(k_state, (batch, state_dim), jnp.float32)
    params = init_policy_params(k_params, state_dim, action_dim, hidden_layers)

    # One-time prep (hoisted out of the forward per perf review).
    prepped, act_dim = prepare_policy_params(params)

    logits = policy_network_forward(state, prepped, action_dim=act_dim)
    jax.block_until_ready(logits)

    ref = policy_network_ref(state, params)
    assert logits.shape == (batch, action_dim), logits.shape
    # bf16 matmul inputs + bf16 output store vs f32 reference -> loose tolerance.
    assert jnp.allclose(logits, ref, atol=3e-2, rtol=3e-2), (
        "mismatch vs reference: max abs err "
        f"{jnp.max(jnp.abs(logits - ref))}")

    # Odd, small batch exercising the block==full-array path (grid=(1,)).
    small = policy_network_forward(state[:5], prepped, action_dim=act_dim)
    jax.block_until_ready(small)
    assert small.shape == (5, action_dim)
    assert jnp.allclose(small, ref[:5], atol=3e-2, rtol=3e-2)

    # Large ragged batch exercising the tiled path (grid=cdiv(B,512), masked
    # final block, no pad-copy of the activations).
    big_state = jax.random.normal(key, (MAX_TILE_B * 2 + 60, state_dim),
                                  jnp.float32)
    big = policy_network_forward(big_state, prepped, action_dim=act_dim)
    jax.block_until_ready(big)
    big_ref = policy_network_ref(big_state, params)
    assert big.shape == (big_state.shape[0], action_dim)
    assert jnp.allclose(big, big_ref, atol=3e-2, rtol=3e-2)

    print("KERNEL_OK")
</pallas_src>

<mosaic_0001>
module attributes {stable_mosaic.version = 11 : i64} {
  func.func @_policy_mlp_kernel(%arg0: i32, %arg1: memref<256x16xbf16, #tpu.memory_space<vmem>>, %arg2: memref<16x128xbf16, #tpu.memory_space<vmem>>, %arg3: memref<1x128xf32, #tpu.memory_space<vmem>>, %arg4: memref<128x128xbf16, #tpu.memory_space<vmem>>, %arg5: memref<1x128xf32, #tpu.memory_space<vmem>>, %arg6: memref<128x128xbf16, #tpu.memory_space<vmem>>, %arg7: memref<1x128xf32, #tpu.memory_space<vmem>>, %arg8: memref<256x128xbf16, #tpu.memory_space<vmem>>) attributes {dimension_semantics = [#tpu.dimension_semantics<parallel>], iteration_bounds = array<i64: 1>, scalar_prefetch = 0 : i64, scratch_operands = 0 : i64, tpu.core_type = #tpu.core_type<tc>, window_params = [{transform_indices = @transform_0, window_bounds = array<i64: 256, 16>}, {pipeline_mode = #tpu.pipeline_mode<synchronous>, transform_indices = @transform_1, window_bounds = array<i64: 16, 128>}, {pipeline_mode = #tpu.pipeline_mode<synchronous>, transform_indices = @transform_2, window_bounds = array<i64: 1, 128>}, {pipeline_mode = #tpu.pipeline_mode<synchronous>, transform_indices = @transform_3, window_bounds = array<i64: 128, 128>}, {pipeline_mode = #tpu.pipeline_mode<synchronous>, transform_indices = @transform_4, window_bounds = array<i64: 1, 128>}, {pipeline_mode = #tpu.pipeline_mode<synchronous>, transform_indices = @transform_5, window_bounds = array<i64: 128, 128>}, {pipeline_mode = #tpu.pipeline_mode<synchronous>, transform_indices = @transform_6, window_bounds = array<i64: 1, 128>}, {transform_indices = @transform_7, window_bounds = array<i64: 256, 128>}]} {
    %c0 = arith.constant 0 : index
    %c0_0 = arith.constant 0 : index
    %0 = vector.load %arg1[%c0, %c0_0] : memref<256x16xbf16, #tpu.memory_space<vmem>>, vector<256x16xbf16>
    %c0_1 = arith.constant 0 : index
    %c0_2 = arith.constant 0 : index
    %1 = vector.load %arg2[%c0_1, %c0_2] : memref<16x128xbf16, #tpu.memory_space<vmem>>, vector<16x128xbf16>
    %cst = arith.constant dense<0.000000e+00> : vector<256x128xf32>
    %2 = tpu.matmul %0, %1, %cst {dimension_numbers = #tpu.dot_dimension_numbers<[1], [0], [0], [1], [0, 0, 1, 1], [], []>} : vector<256x16xbf16>, vector<16x128xbf16>, vector<256x128xf32> -> vector<256x128xf32>
    %c0_3 = arith.constant 0 : index
    %c0_4 = arith.constant 0 : index
    %3 = vector.load %arg3[%c0_3, %c0_4] : memref<1x128xf32, #tpu.memory_space<vmem>>, vector<1x128xf32>
    %4 = vector.broadcast %3 : vector<1x128xf32> to vector<256x128xf32>
    %5 = arith.addf %2, %4 : vector<256x128xf32>
    %cst_5 = arith.constant 0.000000e+00 : f32
    %6 = vector.broadcast %cst_5 : f32 to vector<256x128xf32>
    %7 = arith.maximumf %5, %6 : vector<256x128xf32>
    %8 = arith.truncf %7 : vector<256x128xf32> to vector<256x128xbf16>
    %c0_6 = arith.constant 0 : index
    %c0_7 = arith.constant 0 : index
    %9 = vector.load %arg4[%c0_6, %c0_7] : memref<128x128xbf16, #tpu.memory_space<vmem>>, vector<128x128xbf16>
    %cst_8 = arith.constant dense<0.000000e+00> : vector<256x128xf32>
    %10 = tpu.matmul %8, %9, %cst_8 {dimension_numbers = #tpu.dot_dimension_numbers<[1], [0], [0], [1], [0, 0, 1, 1], [], []>} : vector<256x128xbf16>, vector<128x128xbf16>, vector<256x128xf32> -> vector<256x128xf32>
    %c0_9 = arith.constant 0 : index
    %c0_10 = arith.constant 0 : index
    %11 = vector.load %arg5[%c0_9, %c0_10] : memref<1x128xf32, #tpu.memory_space<vmem>>, vector<1x128xf32>
    %12 = vector.broadcast %11 : vector<1x128xf32> to vector<256x128xf32>
    %13 = arith.addf %10, %12 : vector<256x128xf32>
    %cst_11 = arith.constant 0.000000e+00 : f32
    %14 = vector.broadcast %cst_11 : f32 to vector<256x128xf32>
    %15 = arith.maximumf %13, %14 : vector<256x128xf32>
    %16 = arith.truncf %15 : vector<256x128xf32> to vector<256x128xbf16>
    %c0_12 = arith.constant 0 : index
    %c0_13 = arith.constant 0 : index
    %17 = vector.load %arg6[%c0_12, %c0_13] : memref<128x128xbf16, #tpu.memory_space<vmem>>, vector<128x128xbf16>
    %cst_14 = arith.constant dense<0.000000e+00> : vector<256x128xf32>
    %18 = tpu.matmul %16, %17, %cst_14 {dimension_numbers = #tpu.dot_dimension_numbers<[1], [0], [0], [1], [0, 0, 1, 1], [], []>} : vector<256x128xbf16>, vector<128x128xbf16>, vector<256x128xf32> -> vector<256x128xf32>
    %c0_15 = arith.constant 0 : index
    %c0_16 = arith.constant 0 : index
    %19 = vector.load %arg7[%c0_15, %c0_16] : memref<1x128xf32, #tpu.memory_space<vmem>>, vector<1x128xf32>
    %20 = vector.broadcast %19 : vector<1x128xf32> to vector<256x128xf32>
    %21 = arith.addf %18, %20 : vector<256x128xf32>
    %22 = arith.truncf %21 : vector<256x128xf32> to vector<256x128xbf16>
    %c0_17 = arith.constant 0 : index
    %c0_18 = arith.constant 0 : index
    %23 = vector.load %arg8[%c0_17, %c0_18] : memref<256x128xbf16, #tpu.memory_space<vmem>>, vector<256x128xbf16>
    tpu.vector_store %arg8[%c0_17, %c0_18], %22 {strides = array<i32>} : memref<256x128xbf16, #tpu.memory_space<vmem>>, vector<256x128xbf16>,
    return
  }
  func.func @transform_0(%arg0: i32) -> (i32, i32) {
    %c0_i32 = arith.constant 0 : i32
    %c0_i32_0 = arith.constant 0 : i32
    return %arg0, %c0_i32 : i32, i32
  }
  func.func @transform_1(%arg0: i32) -> (i32, i32) {
    %c0_i32 = arith.constant 0 : i32
    %c0_i32_0 = arith.constant 0 : i32
    %c0_i32_1 = arith.constant 0 : i32
    return %c0_i32, %c0_i32_0 : i32, i32
  }
  func.func @transform_2(%arg0: i32) -> (i32, i32) {
    %c0_i32 = arith.constant 0 : i32
    %c0_i32_0 = arith.constant 0 : i32
    %c0_i32_1 = arith.constant 0 : i32
    return %c0_i32, %c0_i32_0 : i32, i32
  }
  func.func @transform_3(%arg0: i32) -> (i32, i32) {
    %c0_i32 = arith.constant 0 : i32
    %c0_i32_0 = arith.constant 0 : i32
    %c0_i32_1 = arith.constant 0 : i32
    return %c0_i32, %c0_i32_0 : i32, i32
  }
  func.func @transform_4(%arg0: i32) -> (i32, i32) {
    %c0_i32 = arith.constant 0 : i32
    %c0_i32_0 = arith.constant 0 : i32
    %c0_i32_1 = arith.constant 0 : i32
    return %c0_i32, %c0_i32_0 : i32, i32
  }
  func.func @transform_5(%arg0: i32) -> (i32, i32) {
    %c0_i32 = arith.constant 0 : i32
    %c0_i32_0 = arith.constant 0 : i32
    %c0_i32_1 = arith.constant 0 : i32
    return %c0_i32, %c0_i32_0 : i32, i32
  }
  func.func @transform_6(%arg0: i32) -> (i32, i32) {
    %c0_i32 = arith.constant 0 : i32
    %c0_i32_0 = arith.constant 0 : i32
    %c0_i32_1 = arith.constant 0 : i32
    return %c0_i32, %c0_i32_0 : i32, i32
  }
  func.func @transform_7(%arg0: i32) -> (i32, i32) {
    %c0_i32 = arith.constant 0 : i32
    %c0_i32_0 = arith.constant 0 : i32
    return %arg0, %c0_i32 : i32, i32
  }
}

</mosaic_0001>

<llo_original>
// kernel: policy_network_forward.1
$region0: #{policy_network_forward.1}
  #allocation0 [shape = 'u32[]', space=smem, size = 0x4, offset = 0x4, fixed_abs, tag = 'smem constant byte address 0x4 - core index']
  #allocation1 [shape = 'u32[72,128]{1,0:T(1,128)}', space=vmem, size = 0x9000, scoped, tag = 'internal scratch']
  %s0 = inlined_call_operand.vmem [shape: bf16[256,16], index: 0, kind: input, shape index: {}]
  %s1 = inlined_call_operand.vmem [shape: bf16[16,128], index: 1, kind: input, shape index: {}]
  %s2 = inlined_call_operand.vmem [shape: f32[1,128], index: 2, kind: input, shape index: {}]
  %s3 = inlined_call_operand.vmem [shape: bf16[128,128], index: 3, kind: input, shape index: {}]
  %s4 = inlined_call_operand.vmem [shape: f32[1,128], index: 4, kind: input, shape index: {}]
  %s5 = inlined_call_operand.vmem [shape: bf16[128,128], index: 5, kind: input, shape index: {}]
  %s6 = inlined_call_operand.vmem [shape: f32[1,128], index: 6, kind: input, shape index: {}]
  %s7 = inlined_call_operand.vmem [shape: bf16[256,128], index: 7, kind: output, shape index: {}]
  %s8 = sld [smem:[#allocation0]]
  $region38: #{policy_network_forward.1} parent=0
    _
  %s10 = ssub.s32 1, %s8
  %s11 = scalar_select 0, %s10, %s8
  // Predicated region
  $region2: #{policy_network_forward.1} parent=0 // pred_check
    _
  $region3: #{policy_network_forward.1} parent=0 // pred_check_branch
    %13 = sbr.rel (0) target = $region5
  $region4: #{policy_network_forward.1} parent=0 // pred_region
    _
  $region5: #{policy_network_forward.1} parent=0 // pred_fallthru
    _
  // Predicated region
  $region6: #{policy_network_forward.1} parent=0 // pred_check
    _
  $region7: #{policy_network_forward.1} parent=0 // pred_check_branch
    %15 = sbr.rel (0) target = $region9
  $region8: #{policy_network_forward.1} parent=0 // pred_region
    _
  $region9: #{policy_network_forward.1} parent=0 // pred_fallthru
    _
  // Predicated region
  $region10: #{policy_network_forward.1} parent=0 // pred_check
    _
  $region11: #{policy_network_forward.1} parent=0 // pred_check_branch
    %17 = sbr.rel (0) target = $region13
  $region12: #{policy_network_forward.1} parent=0 // pred_region
    _
  $region13: #{policy_network_forward.1} parent=0 // pred_fallthru
    _
  // Predicated region
  $region14: #{policy_network_forward.1} parent=0 // pred_check
    _
  $region15: #{policy_network_forward.1} parent=0 // pred_check_branch
    %19 = sbr.rel (0) target = $region17
  $region16: #{policy_network_forward.1} parent=0 // pred_region
    _
  $region17: #{policy_network_forward.1} parent=0 // pred_fallthru
    _
  // Predicated region
  $region18: #{policy_network_forward.1} parent=0 // pred_check
    _
  $region19: #{policy_network_forward.1} parent=0 // pred_check_branch
    %21 = sbr.rel (0) target = $region21
  $region20: #{policy_network_forward.1} parent=0 // pred_region
    _
  $region21: #{policy_network_forward.1} parent=0 // pred_fallthru
    _
  // Predicated region
  $region22: #{policy_network_forward.1} parent=0 // pred_check
    _
  $region23: #{policy_network_forward.1} parent=0 // pred_check_branch
    %23 = sbr.rel (0) target = $region25
  $region24: #{policy_network_forward.1} parent=0 // pred_region
    _
  $region25: #{policy_network_forward.1} parent=0 // pred_fallthru
    _
  // Predicated region
  $region26: #{policy_network_forward.1} parent=0 // pred_check
    _
  $region27: #{policy_network_forward.1} parent=0 // pred_check_branch
    %25 = sbr.rel (0) target = $region29
  $region28: #{policy_network_forward.1} parent=0 // pred_region
    _
  $region29: #{policy_network_forward.1} parent=0 // pred_fallthru
    _
  %v27 = vld [vmem:[%s0] sm:$0xf]
  %v28 = vld [vmem:[%s0 + $0x4] sm:$0xf]
  %v29 = vld [vmem:[%s0 + $0x8] sm:$0xf]
  %v30 = vld [vmem:[%s0 + $0xc] sm:$0xf]
  %v31 = vld [vmem:[%s0 + $0x10] sm:$0xf]
  %v32 = vld [vmem:[%s0 + $0x14] sm:$0xf]
  %v33 = vld [vmem:[%s0 + $0x18] sm:$0xf]
  %v34 = vld [vmem:[%s0 + $0x1c] sm:$0xf]
  %v35 = vld [vmem:[%s0 + $0x20] sm:$0xf]
  %v36 = vld [vmem:[%s0 + $0x24] sm:$0xf]
  %v37 = vld [vmem:[%s0 + $0x28] sm:$0xf]
  %v38 = vld [vmem:[%s0 + $0x2c] sm:$0xf]
  %v39 = vld [vmem:[%s0 + $0x30] sm:$0xf]
  %v40 = vld [vmem:[%s0 + $0x34] sm:$0xf]
  %v41 = vld [vmem:[%s0 + $0x38] sm:$0xf]
  %v42 = vld [vmem:[%s0 + $0x3c] sm:$0xf]
  %v43 = vld [vmem:[%s0 + $0x40] sm:$0xf]
  %v44 = vld [vmem:[%s0 + $0x44] sm:$0xf]
  %v45 = vld [vmem:[%s0 + $0x48] sm:$0xf]
  %v46 = vld [vmem:[%s0 + $0x4c] sm:$0xf]
  %v47 = vld [vmem:[%s0 + $0x50] sm:$0xf]
  %v48 = vld [vmem:[%s0 + $0x54] sm:$0xf]
  %v49 = vld [vmem:[%s0 + $0x58] sm:$0xf]
  %v50 = vld [vmem:[%s0 + $0x5c] sm:$0xf]
  %v51 = vld [vmem:[%s0 + $0x60] sm:$0xf]
  %v52 = vld [vmem:[%s0 + $0x64] sm:$0xf]
  %v53 = vld [vmem:[%s0 + $0x68] sm:$0xf]
  %v54 = vld [vmem:[%s0 + $0x6c] sm:$0xf]
  %v55 = vld [vmem:[%s0 + $0x70] sm:$0xf]
  %v56 = vld [vmem:[%s0 + $0x74] sm:$0xf]
  %v57 = vld [vmem:[%s0 + $0x78] sm:$0xf]
  %v58 = vld [vmem:[%s0 + $0x7c] sm:$0xf]
  %v59 = vld [vmem:[%s1] sm:$0xf]
  %v60 = vld [vmem:[%s1 + $0x4] sm:$0xf]
  %v61 = vld [vmem:[%s2] sm:$0x1]
  %v63 = vperm.slane %v61, 0
  %v97 = vunpack.c.l.b16 %v27
  %v98 = vunpack.c.l.b16 %v28
  %v99 = vunpack.c.l.b16 %v29
  %v100 = vunpack.c.l.b16 %v30
  %v101 = vunpack.c.l.b16 %v31
  %v102 = vunpack.c.l.b16 %v32
  %v103 = vunpack.c.l.b16 %v33
  %v104 = vunpack.c.l.b16 %v34
  %v105 = vunpack.c.l.b16 %v35
  %v106 = vunpack.c.l.b16 %v36
  %v107 = vunpack.c.l.b16 %v37
  %v108 = vunpack.c.l.b16 %v38
  %v109 = vunpack.c.l.b16 %v39
  %v110 = vunpack.c.l.b16 %v40
  %v111 = vunpack.c.l.b16 %v41
  %v112 = vunpack.c.l.b16 %v42
  %v113 = vunpack.c.l.b16 %v43
  %v114 = vunpack.c.l.b16 %v44
  %v115 = vunpack.c.l.b16 %v45
  %v116 = vunpack.c.l.b16 %v46
  %v117 = vunpack.c.l.b16 %v47
  %v118 = vunpack.c.l.b16 %v48
  %v119 = vunpack.c.l.b16 %v49
  %v120 = vunpack.c.l.b16 %v50
  %v121 = vunpack.c.l.b16 %v51
  %v122 = vunpack.c.l.b16 %v52
  %v123 = vunpack.c.l.b16 %v53
  %v124 = vunpack.c.l.b16 %v54
  %v125 = vunpack.c.l.b16 %v55
  %v126 = vunpack.c.l.b16 %v56
  %v127 = vunpack.c.l.b16 %v57
  %v128 = vunpack.c.l.b16 %v58
  %v129 = vpack.c.b16 %v98, %v97
  %v130 = vpack.c.b16 %v100, %v99
  %v131 = vpack.c.b16 %v102, %v101
  %v132 = vpack.c.b16 %v104, %v103
  %v133 = vpack.c.b16 %v106, %v105
  %v134 = vpack.c.b16 %v108, %v107
  %v135 = vpack.c.b16 %v110, %v109
  %v136 = vpack.c.b16 %v112, %v111
  %v137 = vpack.c.b16 %v114, %v113
  %v138 = vpack.c.b16 %v116, %v115
  %v139 = vpack.c.b16 %v118, %v117
  %v140 = vpack.c.b16 %v120, %v119
  %v141 = vpack.c.b16 %v122, %v121
  %v142 = vpack.c.b16 %v124, %v123
  %v143 = vpack.c.b16 %v126, %v125
  %v144 = vpack.c.b16 %v128, %v127
  %v147 = vunpack.c.l.b16 %v59
  %v148 = vunpack.c.l.b16 %v60
  %v149 = vpack.c.b16 %v148, %v147
  %vm151 = vcmask 130048
  %v153 = vsel %vm151, %v129, 0
  %v156 = vsel %vm151, %v130, 0
  %v159 = vsel %vm151, %v131, 0
  %v162 = vsel %vm151, %v132, 0
  %v165 = vsel %vm151, %v133, 0
  %v168 = vsel %vm151, %v134, 0
  %v171 = vsel %vm151, %v135, 0
  %v174 = vsel %vm151, %v136, 0
  %v177 = vsel %vm151, %v137, 0
  %v180 = vsel %vm151, %v138, 0
  %v183 = vsel %vm151, %v139, 0
  %v186 = vsel %vm151, %v140, 0
  %v189 = vsel %vm151, %v141, 0
  %v192 = vsel %vm151, %v142, 0
  %v195 = vsel %vm151, %v143, 0
  %v198 = vsel %vm151, %v144, 0
  %200 = vmatpush.bf16.msra.mxu0 0
  %201 = vmatpush.bf16.msra.mxu0 0
  %202 = vmatpush.bf16.msra.mxu0 0
  %203 = vmatpush.bf16.msra.mxu0 0
  %204 = vmatpush.bf16.msra.mxu0 0
  %205 = vmatpush.bf16.msra.mxu0 0
  %206 = vmatpush.bf16.msra.mxu0 0
  %207 = vmatpush.bf16.msra.mxu0 %v149
  %208 = vmatmul.bf16.gmra.mxu0 %v153
  %v209 = vpop.f32.mrf.mxu0
  %v210 = vadd.f32 %v63, %v209
  %v211 = vpop.f32.mrf.mxu0
  %v212 = vadd.f32 %v63, %v211
  %213 = vmatmul.bf16.gmra.mxu0 %v156
  %v214 = vpop.f32.mrf.mxu0
  %v215 = vadd.f32 %v63, %v214
  %v216 = vpop.f32.mrf.mxu0
  %v217 = vadd.f32 %v63, %v216
  %218 = vmatmul.bf16.gmra.mxu0 %v159
  %v219 = vpop.f32.mrf.mxu0
  %v220 = vadd.f32 %v63, %v219
  %v221 = vpop.f32.mrf.mxu0
  %v222 = vadd.f32 %v63, %v221
  %223 = vmatmul.bf16.gmra.mxu0 %v162
  %v224 = vpop.f32.mrf.mxu0
  %v225 = vadd.f32 %v63, %v224
  %v226 = vpop.f32.mrf.mxu0
  %v227 = vadd.f32 %v63, %v226
  %228 = vmatmul.bf16.gmra.mxu0 %v165
  %v229 = vpop.f32.mrf.mxu0
  %v230 = vadd.f32 %v63, %v229
  %v231 = vpop.f32.mrf.mxu0
  %v232 = vadd.f32 %v63, %v231
  %233 = vmatmul.bf16.gmra.mxu0 %v168
  %v234 = vpop.f32.mrf.mxu0
  %v235 = vadd.f32 %v63, %v234
  %v236 = vpop.f32.mrf.mxu0
  %v237 = vadd.f32 %v63, %v236
  %238 = vmatmul.bf16.gmra.mxu0 %v171
  %v239 = vpop.f32.mrf.mxu0
  %v240 = vadd.f32 %v63, %v239
  %v241 = vpop.f32.mrf.mxu0
  %v242 = vadd.f32 %v63, %v241
  %243 = vmatmul.bf16.gmra.mxu0 %v174
  %v244 = vpop.f32.mrf.mxu0
  %v245 = vadd.f32 %v63, %v244
  %v246 = vpop.f32.mrf.mxu0
  %v247 = vadd.f32 %v63, %v246
  %248 = vmatmul.bf16.gmra.mxu0 %v177
  %v249 = vpop.f32.mrf.mxu0
  %v250 = vadd.f32 %v63, %v249
  %v251 = vpop.f32.mrf.mxu0
  %v252 = vadd.f32 %v63, %v251
  %253 = vmatmul.bf16.gmra.mxu0 %v180
  %v254 = vpop.f32.mrf.mxu0
  %v255 = vadd.f32 %v63, %v254
  %v256 = vpop.f32.mrf.mxu0
  %v257 = vadd.f32 %v63, %v256
  %258 = vmatmul.bf16.gmra.mxu0 %v183
  %v259 = vpop.f32.mrf.mxu0
  %v260 = vadd.f32 %v63, %v259
  %v261 = vpop.f32.mrf.mxu0
  %v262 = vadd.f32 %v63, %v261
  %263 = vmatmul.bf16.gmra.mxu0 %v186
  %v264 = vpop.f32.mrf.mxu0
  %v265 = vadd.f32 %v63, %v264
  %v266 = vpop.f32.mrf.mxu0
  %v267 = vadd.f32 %v63, %v266
  %268 = vmatmul.bf16.gmra.mxu0 %v189
  %v269 = vpop.f32.mrf.mxu0
  %v270 = vadd.f32 %v63, %v269
  %v271 = vpop.f32.mrf.mxu0
  %v272 = vadd.f32 %v63, %v271
  %273 = vmatmul.bf16.gmra.mxu0 %v192
  %v274 = vpop.f32.mrf.mxu0
  %v275 = vadd.f32 %v63, %v274
  %v276 = vpop.f32.mrf.mxu0
  %v277 = vadd.f32 %v63, %v276
  %278 = vmatmul.bf16.gmra.mxu0 %v195
  %v279 = vpop.f32.mrf.mxu0
  %v280 = vadd.f32 %v63, %v279
  %v281 = vpop.f32.mrf.mxu0
  %v282 = vadd.f32 %v63, %v281
  %283 = vmatmul.bf16.gmra.mxu0 %v198
  %v284 = vpop.f32.mrf.mxu0
  %v285 = vadd.f32 %v63, %v284
  %v286 = vpop.f32.mrf.mxu0
  %v287 = vadd.f32 %v63, %v286
  %288 = vdwg.mxu0
  %v289 = vmax.f32 %v210, 0.0
  %v290 = vmax.f32 %v212, 0.0
  %v291 = vmax.f32 %v215, 0.0
  %v292 = vmax.f32 %v217, 0.0
  %v293 = vmax.f32 %v220, 0.0
  %v294 = vmax.f32 %v222, 0.0
  %v295 = vmax.f32 %v225, 0.0
  %v296 = vmax.f32 %v227, 0.0
  %v297 = vmax.f32 %v230, 0.0
  %v298 = vmax.f32 %v232, 0.0
  %v299 = vmax.f32 %v235, 0.0
  %v300 = vmax.f32 %v237, 0.0
  %v301 = vmax.f32 %v240, 0.0
  %v302 = vmax.f32 %v242, 0.0
  %v303 = vmax.f32 %v245, 0.0
  %v304 = vmax.f32 %v247, 0.0
  %v305 = vmax.f32 %v250, 0.0
  %v306 = vmax.f32 %v252, 0.0
  %v307 = vmax.f32 %v255, 0.0
  %v308 = vmax.f32 %v257, 0.0
  %v309 = vmax.f32 %v260, 0.0
  %v310 = vmax.f32 %v262, 0.0
  %v311 = vmax.f32 %v265, 0.0
  %v312 = vmax.f32 %v267, 0.0
  %v313 = vmax.f32 %v270, 0.0
  %v314 = vmax.f32 %v272, 0.0
  %v315 = vmax.f32 %v275, 0.0
  %v316 = vmax.f32 %v277, 0.0
  %v317 = vmax.f32 %v280, 0.0
  %v318 = vmax.f32 %v282, 0.0
  %v319 = vmax.f32 %v285, 0.0
  %v320 = vmax.f32 %v287, 0.0
  %v321 = vpack.c.bf16 %v290, %v289
  %v322 = vpack.c.bf16 %v292, %v291
  %v323 = vpack.c.bf16 %v294, %v293
  %v324 = vpack.c.bf16 %v296, %v295
  %v325 = vpack.c.bf16 %v298, %v297
  %v326 = vpack.c.bf16 %v300, %v299
  %v327 = vpack.c.bf16 %v302, %v301
  %v328 = vpack.c.bf16 %v304, %v303
  %v329 = vpack.c.bf16 %v306, %v305
  %v330 = vpack.c.bf16 %v308, %v307
  %v331 = vpack.c.bf16 %v310, %v309
  %v332 = vpack.c.bf16 %v312, %v311
  %v333 = vpack.c.bf16 %v314, %v313
  %v334 = vpack.c.bf16 %v316, %v315
  %v335 = vpack.c.bf16 %v318, %v317
  %v336 = vpack.c.bf16 %v320, %v319
  %v337 = vld [vmem:[%s3] sm:$0xf]
  %v338 = vld [vmem:[%s3 + $0x4] sm:$0xf]
  %v339 = vld [vmem:[%s3 + $0x8] sm:$0xf]
  %v340 = vld [vmem:[%s3 + $0xc] sm:$0xf]
  %v341 = vld [vmem:[%s3 + $0x10] sm:$0xf]
  %v342 = vld [vmem:[%s3 + $0x14] sm:$0xf]
  %v343 = vld [vmem:[%s3 + $0x18] sm:$0xf]
  %v344 = vld [vmem:[%s3 + $0x1c] sm:$0xf]
  %v345 = vld [vmem:[%s3 + $0x20] sm:$0xf]
  %v346 = vld [vmem:[%s3 + $0x24] sm:$0xf]
  %v347 = vld [vmem:[%s3 + $0x28] sm:$0xf]
  %v348 = vld [vmem:[%s3 + $0x2c] sm:$0xf]
  %v349 = vld [vmem:[%s3 + $0x30] sm:$0xf]
  %v350 = vld [vmem:[%s3 + $0x34] sm:$0xf]
  %v351 = vld [vmem:[%s3 + $0x38] sm:$0xf]
  %v352 = vld [vmem:[%s3 + $0x3c] sm:$0xf]
  %v353 = vld [vmem:[%s4] sm:$0x1]
  %v355 = vperm.slane %v353, 0
  %v373 = vunpack.c.l.b16 %v337
  %v374 = vunpack.c.l.b16 %v338
  %v375 = vunpack.c.l.b16 %v339
  %v376 = vunpack.c.l.b16 %v340
  %v377 = vunpack.c.l.b16 %v341
  %v378 = vunpack.c.l.b16 %v342
  %v379 = vunpack.c.l.b16 %v343
  %v380 = vunpack.c.l.b16 %v344
  %v381 = vunpack.c.l.b16 %v345
  %v382 = vunpack.c.l.b16 %v346
  %v383 = vunpack.c.l.b16 %v347
  %v384 = vunpack.c.l.b16 %v348
  %v385 = vunpack.c.l.b16 %v349
  %v386 = vunpack.c.l.b16 %v350
  %v387 = vunpack.c.l.b16 %v351
  %v388 = vunpack.c.l.b16 %v352
  %v389 = vpack.c.b16 %v374, %v373
  %v390 = vpack.c.b16 %v376, %v375
  %v391 = vpack.c.b16 %v378, %v377
  %v392 = vpack.c.b16 %v380, %v379
  %v393 = vpack.c.b16 %v382, %v381
  %v394 = vpack.c.b16 %v384, %v383
  %v395 = vpack.c.b16 %v386, %v385
  %v396 = vpack.c.b16 %v388, %v387
  %405 = vmatpush.bf16.msra.mxu0 %v396
  %406 = vmatpush.bf16.msra.mxu0 %v395
  %407 = vmatpush.bf16.msra.mxu0 %v394
  %408 = vmatpush.bf16.msra.mxu0 %v393
  %409 = vmatpush.bf16.msra.mxu0 %v392
  %410 = vmatpush.bf16.msra.mxu0 %v391
  %411 = vmatpush.bf16.msra.mxu0 %v390
  %412 = vmatpush.bf16.msra.mxu0 %v389
  %413 = vmatmul.bf16.gmra.mxu0 %v321
  %v414 = vpop.f32.mrf.mxu0
  %v415 = vadd.f32 %v355, %v414
  %v416 = vpop.f32.mrf.mxu0
  %v417 = vadd.f32 %v355, %v416
  %418 = vmatmul.bf16.gmra.mxu0 %v322
  %v419 = vpop.f32.mrf.mxu0
  %v420 = vadd.f32 %v355, %v419
  %v421 = vpop.f32.mrf.mxu0
  %v422 = vadd.f32 %v355, %v421
  %423 = vmatmul.bf16.gmra.mxu0 %v323
  %v424 = vpop.f32.mrf.mxu0
  %v425 = vadd.f32 %v355, %v424
  %v426 = vpop.f32.mrf.mxu0
  %v427 = vadd.f32 %v355, %v426
  %428 = vmatmul.bf16.gmra.mxu0 %v324
  %v429 = vpop.f32.mrf.mxu0
  %v430 = vadd.f32 %v355, %v429
  %v431 = vpop.f32.mrf.mxu0
  %v432 = vadd.f32 %v355, %v431
  %433 = vmatmul.bf16.gmra.mxu0 %v325
  %v434 = vpop.f32.mrf.mxu0
  %v435 = vadd.f32 %v355, %v434
  %v436 = vpop.f32.mrf.mxu0
  %v437 = vadd.f32 %v355, %v436
  %438 = vmatmul.bf16.gmra.mxu0 %v326
  %v439 = vpop.f32.mrf.mxu0
  %v440 = vadd.f32 %v355, %v439
  %v441 = vpop.f32.mrf.mxu0
  %v442 = vadd.f32 %v355, %v441
  %443 = vmatmul.bf16.gmra.mxu0 %v327
  %v444 = vpop.f32.mrf.mxu0
  %v445 = vadd.f32 %v355, %v444
  %v446 = vpop.f32.mrf.mxu0
  %v447 = vadd.f32 %v355, %v446
  %448 = vmatmul.bf16.gmra.mxu0 %v328
  %v449 = vpop.f32.mrf.mxu0
  %v450 = vadd.f32 %v355, %v449
  %v451 = vpop.f32.mrf.mxu0
  %v452 = vadd.f32 %v355, %v451
  %453 = vmatmul.bf16.gmra.mxu0 %v329
  %v454 = vpop.f32.mrf.mxu0
  %v455 = vadd.f32 %v355, %v454
  %v456 = vpop.f32.mrf.mxu0
  %v457 = vadd.f32 %v355, %v456
  %458 = vmatmul.bf16.gmra.mxu0 %v330
  %v459 = vpop.f32.mrf.mxu0
  %v460 = vadd.f32 %v355, %v459
  %v461 = vpop.f32.mrf.mxu0
  %v462 = vadd.f32 %v355, %v461
  %463 = vmatmul.bf16.gmra.mxu0 %v331
  %v464 = vpop.f32.mrf.mxu0
  %v465 = vadd.f32 %v355, %v464
  %v466 = vpop.f32.mrf.mxu0
  %v467 = vadd.f32 %v355, %v466
  %468 = vmatmul.bf16.gmra.mxu0 %v332
  %v469 = vpop.f32.mrf.mxu0
  %v470 = vadd.f32 %v355, %v469
  %v471 = vpop.f32.mrf.mxu0
  %v472 = vadd.f32 %v355, %v471
  %473 = vmatmul.bf16.gmra.mxu0 %v333
  %v474 = vpop.f32.mrf.mxu0
  %v475 = vadd.f32 %v355, %v474
  %v476 = vpop.f32.mrf.mxu0
  %v477 = vadd.f32 %v355, %v476
  %478 = vmatmul.bf16.gmra.mxu0 %v334
  %v479 = vpop.f32.mrf.mxu0
  %v480 = vadd.f32 %v355, %v479
  %v481 = vpop.f32.mrf.mxu0
  %v482 = vadd.f32 %v355, %v481
  %483 = vmatmul.bf16.gmra.mxu0 %v335
  %v484 = vpop.f32.mrf.mxu0
  %v485 = vadd.f32 %v355, %v484
  %v486 = vpop.f32.mrf.mxu0
  %v487 = vadd.f32 %v355, %v486
  %488 = vmatmul.bf16.gmra.mxu0 %v336
  %v489 = vpop.f32.mrf.mxu0
  %v490 = vadd.f32 %v355, %v489
  %v491 = vpop.f32.mrf.mxu0
  %v492 = vadd.f32 %v355, %v491
  %493 = vdwg.mxu0
  %v494 = vmax.f32 %v415, 0.0
  %v495 = vmax.f32 %v417, 0.0
  %v496 = vmax.f32 %v420, 0.0
  %v497 = vmax.f32 %v422, 0.0
  %v498 = vmax.f32 %v425, 0.0
  %v499 = vmax.f32 %v427, 0.0
  %v500 = vmax.f32 %v430, 0.0
  %v501 = vmax.f32 %v432, 0.0
  %v502 = vmax.f32 %v435, 0.0
  %v503 = vmax.f32 %v437, 0.0
  %v504 = vmax.f32 %v440, 0.0
  %v505 = vmax.f32 %v442, 0.0
  %v506 = vmax.f32 %v445, 0.0
  %v507 = vmax.f32 %v447, 0.0
  %v508 = vmax.f32 %v450, 0.0
  %v509 = vmax.f32 %v452, 0.0
  %v510 = vmax.f32 %v455, 0.0
  %v511 = vmax.f32 %v457, 0.0
  %v512 = vmax.f32 %v460, 0.0
  %v513 = vmax.f32 %v462, 0.0
  %v514 = vmax.f32 %v465, 0.0
  %v515 = vmax.f32 %v467, 0.0
  %v516 = vmax.f32 %v470, 0.0
  %v517 = vmax.f32 %v472, 0.0
  %v518 = vmax.f32 %v475, 0.0
  %v519 = vmax.f32 %v477, 0.0
  %v520 = vmax.f32 %v480, 0.0
  %v521 = vmax.f32 %v482, 0.0
  %v522 = vmax.f32 %v485, 0.0
  %v523 = vmax.f32 %v487, 0.0
  %v524 = vmax.f32 %v490, 0.0
  %v525 = vmax.f32 %v492, 0.0
  %v526 = vpack.c.bf16 %v495, %v494
  %v527 = vpack.c.bf16 %v497, %v496
  %v528 = vpack.c.bf16 %v499, %v498
  %v529 = vpack.c.bf16 %v501, %v500
  %v530 = vpack.c.bf16 %v503, %v502
  %v531 = vpack.c.bf16 %v505, %v504
  %v532 = vpack.c.bf16 %v507, %v506
  %v533 = vpack.c.bf16 %v509, %v508
  %v534 = vpack.c.bf16 %v511, %v510
  %v535 = vpack.c.bf16 %v513, %v512
  %v536 = vpack.c.bf16 %v515, %v514
  %v537 = vpack.c.bf16 %v517, %v516
  %v538 = vpack.c.bf16 %v519, %v518
  %v539 = vpack.c.bf16 %v521, %v520
  %v540 = vpack.c.bf16 %v523, %v522
  %v541 = vpack.c.bf16 %v525, %v524
  %v542 = vld [vmem:[%s5] sm:$0xf]
  %v543 = vld [vmem:[%s5 + $0x4] sm:$0xf]
  %v544 = vld [vmem:[%s5 + $0x8] sm:$0xf]
  %v545 = vld [vmem:[%s5 + $0xc] sm:$0xf]
  %v546 = vld [vmem:[%s5 + $0x10] sm:$0xf]
  %v547 = vld [vmem:[%s5 + $0x14] sm:$0xf]
  %v548 = vld [vmem:[%s5 + $0x18] sm:$0xf]
  %v549 = vld [vmem:[%s5 + $0x1c] sm:$0xf]
  %v550 = vld [vmem:[%s5 + $0x20] sm:$0xf]
  %v551 = vld [vmem:[%s5 + $0x24] sm:$0xf]
  %v552 = vld [vmem:[%s5 + $0x28] sm:$0xf]
  %v553 = vld [vmem:[%s5 + $0x2c] sm:$0xf]
  %v554 = vld [vmem:[%s5 + $0x30] sm:$0xf]
  %v555 = vld [vmem:[%s5 + $0x34] sm:$0xf]
  %v556 = vld [vmem:[%s5 + $0x38] sm:$0xf]
  %v557 = vld [vmem:[%s5 + $0x3c] sm:$0xf]
  %v558 = vld [vmem:[%s6] sm:$0x1]
  %v560 = vperm.slane %v558, 0
  %v578 = vunpack.c.l.b16 %v542
  %v579 = vunpack.c.l.b16 %v543
  %v580 = vunpack.c.l.b16 %v544
  %v581 = vunpack.c.l.b16 %v545
  %v582 = vunpack.c.l.b16 %v546
  %v583 = vunpack.c.l.b16 %v547
  %v584 = vunpack.c.l.b16 %v548
  %v585 = vunpack.c.l.b16 %v549
  %v586 = vunpack.c.l.b16 %v550
  %v587 = vunpack.c.l.b16 %v551
  %v588 = vunpack.c.l.b16 %v552
  %v589 = vunpack.c.l.b16 %v553
  %v590 = vunpack.c.l.b16 %v554
  %v591 = vunpack.c.l.b16 %v555
  %v592 = vunpack.c.l.b16 %v556
  %v593 = vunpack.c.l.b16 %v557
  %v594 = vpack.c.b16 %v579, %v578
  %v595 = vpack.c.b16 %v581, %v580
  %v596 = vpack.c.b16 %v583, %v582
  %v597 = vpack.c.b16 %v585, %v584
  %v598 = vpack.c.b16 %v587, %v586
  %v599 = vpack.c.b16 %v589, %v588
  %v600 = vpack.c.b16 %v591, %v590
  %v601 = vpack.c.b16 %v593, %v592
  %610 = vmatpush.bf16.msra.mxu0 %v601
  %611 = vmatpush.bf16.msra.mxu0 %v600
  %612 = vmatpush.bf16.msra.mxu0 %v599
  %613 = vmatpush.bf16.msra.mxu0 %v598
  %614 = vmatpush.bf16.msra.mxu0 %v597
  %615 = vmatpush.bf16.msra.mxu0 %v596
  %616 = vmatpush.bf16.msra.mxu0 %v595
  %617 = vmatpush.bf16.msra.mxu0 %v594
  %618 = vmatmul.bf16.gmra.mxu0 %v526
  %v619 = vpop.f32.mrf.mxu0
  %v620 = vadd.f32 %v560, %v619
  %v621 = vpop.f32.mrf.mxu0
  %v622 = vadd.f32 %v560, %v621
  %623 = vmatmul.bf16.gmra.mxu0 %v527
  %v624 = vpop.f32.mrf.mxu0
  %v625 = vadd.f32 %v560, %v624
  %v626 = vpop.f32.mrf.mxu0
  %v627 = vadd.f32 %v560, %v626
  %628 = vmatmul.bf16.gmra.mxu0 %v528
  %v629 = vpop.f32.mrf.mxu0
  %v630 = vadd.f32 %v560, %v629
  %v631 = vpop.f32.mrf.mxu0
  %v632 = vadd.f32 %v560, %v631
  %633 = vmatmul.bf16.gmra.mxu0 %v529
  %v634 = vpop.f32.mrf.mxu0
  %v635 = vadd.f32 %v560, %v634
  %v636 = vpop.f32.mrf.mxu0
  %v637 = vadd.f32 %v560, %v636
  %638 = vmatmul.bf16.gmra.mxu0 %v530
  %v639 = vpop.f32.mrf.mxu0
  %v640 = vadd.f32 %v560, %v639
  %v641 = vpop.f32.mrf.mxu0
  %v642 = vadd.f32 %v560, %v641
  %643 = vmatmul.bf16.gmra.mxu0 %v531
  %v644 = vpop.f32.mrf.mxu0
  %v645 = vadd.f32 %v560, %v644
  %v646 = vpop.f32.mrf.mxu0
  %v647 = vadd.f32 %v560, %v646
  %648 = vmatmul.bf16.gmra.mxu0 %v532
  %v649 = vpop.f32.mrf.mxu0
  %v650 = vadd.f32 %v560, %v649
  %v651 = vpop.f32.mrf.mxu0
  %v652 = vadd.f32 %v560, %v651
  %653 = vmatmul.bf16.gmra.mxu0 %v533
  %v654 = vpop.f32.mrf.mxu0
  %v655 = vadd.f32 %v560, %v654
  %v656 = vpop.f32.mrf.mxu0
  %v657 = vadd.f32 %v560, %v656
  %658 = vmatmul.bf16.gmra.mxu0 %v534
  %v659 = vpop.f32.mrf.mxu0
  %v660 = vadd.f32 %v560, %v659
  %v661 = vpop.f32.mrf.mxu0
  %v662 = vadd.f32 %v560, %v661
  %663 = vmatmul.bf16.gmra.mxu0 %v535
  %v664 = vpop.f32.mrf.mxu0
  %v665 = vadd.f32 %v560, %v664
  %v666 = vpop.f32.mrf.mxu0
  %v667 = vadd.f32 %v560, %v666
  %668 = vmatmul.bf16.gmra.mxu0 %v536
  %v669 = vpop.f32.mrf.mxu0
  %v670 = vadd.f32 %v560, %v669
  %v671 = vpop.f32.mrf.mxu0
  %v672 = vadd.f32 %v560, %v671
  %673 = vmatmul.bf16.gmra.mxu0 %v537
  %v674 = vpop.f32.mrf.mxu0
  %v675 = vadd.f32 %v560, %v674
  %v676 = vpop.f32.mrf.mxu0
  %v677 = vadd.f32 %v560, %v676
  %678 = vmatmul.bf16.gmra.mxu0 %v538
  %v679 = vpop.f32.mrf.mxu0
  %v680 = vadd.f32 %v560, %v679
  %v681 = vpop.f32.mrf.mxu0
  %v682 = vadd.f32 %v560, %v681
  %683 = vmatmul.bf16.gmra.mxu0 %v539
  %v684 = vpop.f32.mrf.mxu0
  %v685 = vadd.f32 %v560, %v684
  %v686 = vpop.f32.mrf.mxu0
  %v687 = vadd.f32 %v560, %v686
  %688 = vmatmul.bf16.gmra.mxu0 %v540
  %v689 = vpop.f32.mrf.mxu0
  %v690 = vadd.f32 %v560, %v689
  %v691 = vpop.f32.mrf.mxu0
  %v692 = vadd.f32 %v560, %v691
  %693 = vmatmul.bf16.gmra.mxu0 %v541
  %v694 = vpop.f32.mrf.mxu0
  %v695 = vadd.f32 %v560, %v694
  %v696 = vpop.f32.mrf.mxu0
  %v697 = vadd.f32 %v560, %v696
  %698 = vdwg.mxu0
  %v699 = vpack.c.bf16 %v620, %v620
  %v700 = vpack.c.bf16 %v622, %v622
  %v701 = vpack.c.bf16 %v625, %v625
  %v702 = vpack.c.bf16 %v627, %v627
  %v703 = vpack.c.bf16 %v630, %v630
  %v704 = vpack.c.bf16 %v632, %v632
  %v705 = vpack.c.bf16 %v635, %v635
  %v706 = vpack.c.bf16 %v637, %v637
  %v707 = vpack.c.bf16 %v640, %v640
  %v708 = vpack.c.bf16 %v642, %v642
  %v709 = vpack.c.bf16 %v645, %v645
  %v710 = vpack.c.bf16 %v647, %v647
  %v711 = vpack.c.bf16 %v650, %v650
  %v712 = vpack.c.bf16 %v652, %v652
  %v713 = vpack.c.bf16 %v655, %v655
  %v714 = vpack.c.bf16 %v657, %v657
  %v715 = vpack.c.bf16 %v660, %v660
  %v716 = vpack.c.bf16 %v662, %v662
  %v717 = vpack.c.bf16 %v665, %v665
  %v718 = vpack.c.bf16 %v667, %v667
  %v719 = vpack.c.bf16 %v670, %v670
  %v720 = vpack.c.bf16 %v672, %v672
  %v721 = vpack.c.bf16 %v675, %v675
  %v722 = vpack.c.bf16 %v677, %v677
  %v723 = vpack.c.bf16 %v680, %v680
  %v724 = vpack.c.bf16 %v682, %v682
  %v725 = vpack.c.bf16 %v685, %v685
  %v726 = vpack.c.bf16 %v687, %v687
  %v727 = vpack.c.bf16 %v690, %v690
  %v728 = vpack.c.bf16 %v692, %v692
  %v729 = vpack.c.bf16 %v695, %v695
  %v730 = vpack.c.bf16 %v697, %v697
  %731 = vst [vmem:[%s7] sm:$0xf] %v699
  %732 = vst [vmem:[%s7 + $0x4] sm:$0xf] %v700
  %733 = vst [vmem:[%s7 + $0x8] sm:$0xf] %v701
  %734 = vst [vmem:[%s7 + $0xc] sm:$0xf] %v702
  %735 = vst [vmem:[%s7 + $0x10] sm:$0xf] %v703
  %736 = vst [vmem:[%s7 + $0x14] sm:$0xf] %v704
  %737 = vst [vmem:[%s7 + $0x18] sm:$0xf] %v705
  %738 = vst [vmem:[%s7 + $0x1c] sm:$0xf] %v706
  %739 = vst [vmem:[%s7 + $0x20] sm:$0xf] %v707
  %740 = vst [vmem:[%s7 + $0x24] sm:$0xf] %v708
  %741 = vst [vmem:[%s7 + $0x28] sm:$0xf] %v709
  %742 = vst [vmem:[%s7 + $0x2c] sm:$0xf] %v710
  %743 = vst [vmem:[%s7 + $0x30] sm:$0xf] %v711
  %744 = vst [vmem:[%s7 + $0x34] sm:$0xf] %v712
  %745 = vst [vmem:[%s7 + $0x38] sm:$0xf] %v713
  %746 = vst [vmem:[%s7 + $0x3c] sm:$0xf] %v714
  %747 = vst [vmem:[%s7 + $0x40] sm:$0xf] %v715
  %748 = vst [vmem:[%s7 + $0x44] sm:$0xf] %v716
  %749 = vst [vmem:[%s7 + $0x48] sm:$0xf] %v717
  %750 = vst [vmem:[%s7 + $0x4c] sm:$0xf] %v718
  %751 = vst [vmem:[%s7 + $0x50] sm:$0xf] %v719
  %752 = vst [vmem:[%s7 + $0x54] sm:$0xf] %v720
  %753 = vst [vmem:[%s7 + $0x58] sm:$0xf] %v721
  %754 = vst [vmem:[%s7 + $0x5c] sm:$0xf] %v722
  %755 = vst [vmem:[%s7 + $0x60] sm:$0xf] %v723
  %756 = vst [vmem:[%s7 + $0x64] sm:$0xf] %v724
  %757 = vst [vmem:[%s7 + $0x68] sm:$0xf] %v725
  %758 = vst [vmem:[%s7 + $0x6c] sm:$0xf] %v726
  %759 = vst [vmem:[%s7 + $0x70] sm:$0xf] %v727
  %760 = vst [vmem:[%s7 + $0x74] sm:$0xf] %v728
  %761 = vst [vmem:[%s7 + $0x78] sm:$0xf] %v729
  %762 = vst [vmem:[%s7 + $0x7c] sm:$0xf] %v730
  // Predicated region
  $region30: #{policy_network_forward.1} parent=0 // pred_check
    _
  $region31: #{policy_network_forward.1} parent=0 // pred_check_branch
    %764 = sbr.rel (0) target = $region33
  $region32: #{policy_network_forward.1} parent=0 // pred_region
    _
  $region33: #{policy_network_forward.1} parent=0 // pred_fallthru
    _
  // Predicated region
  $region34: #{policy_network_forward.1} parent=0 // pred_check
    _
  $region35: #{policy_network_forward.1} parent=0 // pred_check_branch
    %766 = sbr.rel (0) target = $region37
  $region36: #{policy_network_forward.1} parent=0 // pred_region
    _
  $region37: #{policy_network_forward.1} parent=0 // pred_fallthru
    _

</llo_original>
